<compile_context>
chip_gen: v7x
topology: tpu7x:2x2x1
jax: 0.10.0
libtpu: 0.0.40
codegen_flags: <defaults>
</compile_context>

<pallas_src>
import numpy as np
import jax
import jax.numpy as jnp
from jax import lax
from jax.experimental import pallas as pl
from jax.experimental.pallas import tpu as pltpu

HIDDEN = 128   # discriminator hidden width (one MXU lane tile)
_LANE = 128


def _softplus(x):
    # numerically stable softplus == BCEWithLogits building block
    return jnp.maximum(x, 0.0) + jnp.log1p(jnp.exp(-jnp.abs(x)))


def init_discriminator_params(key, in_features, hidden=HIDDEN):
    k1, k2, k3, k4 = jax.random.split(key, 4)
    # w1 dominates HBM traffic and the MXU consumes bf16 anyway -> store bf16
    # permanently (2 B/elem, no per-call convert pass).
    w1 = (jax.random.normal(k1, (in_features, hidden), jnp.float32) * 0.05
          ).astype(jnp.bfloat16)
    b1 = jax.random.normal(k2, (hidden,), jnp.float32) * 0.05
    w2 = jax.random.normal(k3, (hidden,), jnp.float32) * 0.05
    b2 = jax.random.normal(k4, (), jnp.float32) * 0.05
    return w1, b1, w2, b2


def _pick_tk(d, n_rows, w1_itemsize):
    """Largest K tile that (a) is a lane multiple, (b) keeps the double-buffered
    VMEM footprint under ~12 MiB (below the v5e 16 MiB scoped default, far
    below v6e/v7x 32 MiB) and (c) preferably divides D so no tail masking or
    partial tiles are needed."""
    cap = 16384 if 2 * n_rows <= 64 else 8192
    # double-buffered bytes per tk column: real + fake tiles (f32) + w1 tile
    per_col = 2 * (2 * n_rows * 4 + HIDDEN * w1_itemsize)
    budget = 12 * 1024 * 1024
    cap = min(cap, max(_LANE, (budget // per_col) // _LANE * _LANE))
    d_up = pl.cdiv(d, _LANE) * _LANE
    if d_up <= cap:
        return d_up                      # single K step, no masking
    if d % _LANE == 0:
        t = (cap // _LANE) * _LANE
        while t >= _LANE:
            if d % t == 0:
                return t                 # divides D -> no tail masking
            t -= _LANE
    return (cap // _LANE) * _LANE        # tail handled by in-kernel masking


def _run_kernel(real2d, fake2d, w1, b1, w2, b2):
    """real2d/fake2d: (N, D) float32, w1: (D, H) bf16 (or f32, cast in-kernel),
    b1/w2: (1, H) f32, b2: (1, 1) f32 (SMEM scalar)."""
    n_rows, d = real2d.shape
    tk = _pick_tk(d, n_rows, jnp.dtype(w1.dtype).itemsize)
    kt = pl.cdiv(d, tk)
    need_mask = (d % tk) != 0

    def kernel(real_ref, fake_ref, w1_ref, b1_ref, w2_ref, b2_ref, out_ref,
               hr_acc, hf_acc):
        k = pl.program_id(0)

        @pl.when(k == 0)
        def _init():
            hr_acc[...] = jnp.zeros_like(hr_acc)
            hf_acc[...] = jnp.zeros_like(hf_acc)

        xr = real_ref[...]
        xf = fake_ref[...]
        w1t = w1_ref[...]
        if need_mask:
            # zero the K overhang of BOTH operands: garbage (even NaN/Inf) in
            # the partial last tile must not reach the MXU accumulate.
            valid = d - k * tk
            lane = lax.broadcasted_iota(jnp.int32, xr.shape, 1)
            sub = lax.broadcasted_iota(jnp.int32, w1t.shape, 0)
            xr = jnp.where(lane < valid, xr, 0.0)
            xf = jnp.where(lane < valid, xf, 0.0)
            w1t = jnp.where(sub < valid, w1t, 0.0)

        # f32 -> bf16 casts on the VPU (free, memory-bound regime); bf16 x bf16
        # -> f32 accumulation on the MXU.  w1 streams from HBM exactly once.
        w1t = w1t.astype(jnp.bfloat16)
        hr_acc[...] += jnp.dot(xr.astype(jnp.bfloat16), w1t,
                               preferred_element_type=jnp.float32)
        hf_acc[...] += jnp.dot(xf.astype(jnp.bfloat16), w1t,
                               preferred_element_type=jnp.float32)

        @pl.when(k == pl.num_programs(0) - 1)
        def _finalize():
            b1v = b1_ref[...]                               # (1, H) f32
            w2v = w2_ref[...]                               # (1, H) f32
            hr = hr_acc[...] + b1v                          # (N, H) f32
            hf = hf_acc[...] + b1v
            hr = jnp.where(hr >= 0.0, hr, 0.2 * hr)         # LeakyReLU(0.2)
            hf = jnp.where(hf >= 0.0, hf, 0.2 * hf)
            pred_real = (jnp.sum(hr * w2v, axis=-1, keepdims=True)
                         + b2_ref[0, 0])                    # (N, 1)
            pred_fake = (jnp.sum(hf * w2v, axis=-1, keepdims=True)
                         + b2_ref[0, 0])
            mean_real = jnp.mean(pred_real)
            mean_fake = jnp.mean(pred_fake)

            # GANLoss('vanilla', 1.0, 0.0) == BCEWithLogitsLoss:
            #   cri_gan(x, True)  = mean(softplus(-x))
            #   cri_gan(x, False) = mean(softplus(+x))
            # discriminator stage (relativistic average):
            l_d_real = jnp.mean(_softplus(-(pred_real - mean_fake)))
            l_d_fake = jnp.mean(_softplus(pred_fake - mean_real))
            l_d_total = 0.5 * (l_d_real + l_d_fake)
            # generator stage (l_gan_w applied in the wrapper):
            l_g_half = 0.5 * (jnp.mean(_softplus(pred_real - mean_fake)) +
                              jnp.mean(_softplus(-(pred_fake - mean_real))))

            lane_o = lax.broadcasted_iota(jnp.int32, out_ref.shape, 1)
            out = (jnp.where(lane_o == 0, l_d_total, 0.0)
                   + jnp.where(lane_o == 1, l_d_real, 0.0)
                   + jnp.where(lane_o == 2, l_d_fake, 0.0)
                   + jnp.where(lane_o == 3, mean_real, 0.0)
                   + jnp.where(lane_o == 4, mean_fake, 0.0)
                   + jnp.where(lane_o == 5, l_g_half, 0.0))
            out_ref[...] = out.astype(out_ref.dtype)

    grid_spec = pltpu.PrefetchScalarGridSpec(
        num_scalar_prefetch=0,
        grid=(kt,),
        in_specs=[
            pl.BlockSpec((n_rows, tk), lambda k: (0, k)),        # real tile
            pl.BlockSpec((n_rows, tk), lambda k: (0, k)),        # fake tile
            pl.BlockSpec((tk, HIDDEN), lambda k: (k, 0)),        # w1 tile
            pl.BlockSpec((1, HIDDEN), lambda k: (0, 0)),         # b1
            pl.BlockSpec((1, HIDDEN), lambda k: (0, 0)),         # w2
            pl.BlockSpec(memory_space=pltpu.MemorySpace.SMEM),   # b2 scalar
        ],
        out_specs=pl.BlockSpec((1, _LANE), lambda k: (0, 0)),
        scratch_shapes=[pltpu.VMEM((n_rows, HIDDEN), jnp.float32),
                        pltpu.VMEM((n_rows, HIDDEN), jnp.float32)],
    )

    cost = pl.CostEstimate(
        flops=2 * (2 * n_rows) * (kt * tk) * HIDDEN + 8 * n_rows * HIDDEN,
        transcendentals=8 * n_rows,
        bytes_accessed=(2 * n_rows * d * 4                       # real + fake f32
                        + d * HIDDEN * jnp.dtype(w1.dtype).itemsize
                        + 2 * HIDDEN * 4 + 4 + _LANE * 4),
    )

    return pl.pallas_call(
        kernel,
        out_shape=jax.ShapeDtypeStruct((1, _LANE), jnp.float32),
        grid_spec=grid_spec,
        compiler_params=pltpu.CompilerParams(
            dimension_semantics=("arbitrary",)),
        cost_estimate=cost,
    )(real2d, fake2d, w1, b1, w2, b2)


def adversarial_losses(fake, real, params, l_gan_w=1.0):
    """Single fused launch computing BOTH discriminator- and generator-stage
    relativistic GAN losses.  Returns device scalars (no host syncs); converting
    to Python floats for log_dict is left to the caller.

    Inputs are passed straight through (reshape only): no concatenate, no pad,
    no dtype-convert copies in HBM.
    """
    w1, b1, w2, b2 = params
    n = fake.shape[0]
    d = int(np.prod(fake.shape[1:]))
    out = _run_kernel(
        real.reshape(n, d),
        fake.reshape(n, d),                       # PyTorch: fake.detach() for
        w1.reshape(d, HIDDEN),                    # the D-stage (forward-only
        b1.reshape(1, HIDDEN).astype(jnp.float32),#  values are identical)
        w2.reshape(1, HIDDEN).astype(jnp.float32),
        b2.reshape(1, 1).astype(jnp.float32),
    )
    return {
        "l_d_total": out[0, 0],
        "l_d_real": out[0, 1],
        "l_d_fake": out[0, 2],
        "D_real": out[0, 3],
        "D_fake": out[0, 4],
        "l_g_gan": l_gan_w * out[0, 5],
    }


adversarial_losses_jit = jax.jit(adversarial_losses)


# ----- pure-numpy reference (same bf16 rounding of x / w1, f32 math) -----
def _reference(fake, real, params):
    w1, b1, w2, b2 = params
    n = fake.shape[0]
    to_np = lambda a: np.asarray(a, dtype=np.float32)
    xr = to_np(jnp.asarray(real).reshape(n, -1)
               .astype(jnp.bfloat16).astype(jnp.float32))
    xf = to_np(jnp.asarray(fake).reshape(n, -1)
               .astype(jnp.bfloat16).astype(jnp.float32))
    w1f = to_np(jnp.asarray(w1).astype(jnp.bfloat16).astype(jnp.float32))
    b1f, w2f, b2f = to_np(b1), to_np(w2), float(b2)

    def disc(x):
        h = x @ w1f + b1f
        h = np.where(h >= 0.0, h, 0.2 * h)
        return h @ w2f + b2f                                   # (n,)

    def sp(x):
        return np.maximum(x, 0.0) + np.log1p(np.exp(-np.abs(x)))

    pr, pf = disc(xr), disc(xf)
    mr, mf = pr.mean(), pf.mean()
    l_d_real = sp(-(pr - mf)).mean()
    l_d_fake = sp(pf - mr).mean()
    l_d_total = 0.5 * (l_d_real + l_d_fake)
    l_g = 0.5 * (sp(pr - mf).mean() + sp(-(pf - mr)).mean())
    return np.array([l_d_total, l_d_real, l_d_fake, mr, mf, l_g],
                    dtype=np.float32)


if __name__ == "__main__":
    key = jax.random.PRNGKey(0)
    k_fake, k_real, k_params = jax.random.split(key, 3)

    N, C, H, W = 2, 4, 16, 16          # small NCHW inputs
    fake = jax.random.normal(k_fake, (N, C, H, W), jnp.float32)
    real = jax.random.normal(k_real, (N, C, H, W), jnp.float32)
    params = init_discriminator_params(k_params, C * H * W)

    # ONE kernel launch; the (1,128) slab serves both stages.
    losses = adversarial_losses_jit(fake, real, params, 1.0)
    losses = jax.block_until_ready(losses)

    # discriminator stage (module default) and generator stage, no relaunch
    l_d_total = losses["l_d_total"]
    l_g_gan = losses["l_g_gan"]

    # silent correctness check vs the numpy reference (identical bf16-rounded
    # inputs/weights; f32 accumulation) — host conversion is test-only.
    ref = _reference(fake, real, params)
    got = np.array([float(losses["l_d_total"]), float(losses["l_d_real"]),
                    float(losses["l_d_fake"]), float(losses["D_real"]),
                    float(losses["D_fake"]), float(l_g_gan)],
                   dtype=np.float32)
    assert np.allclose(got, ref, rtol=2e-3, atol=2e-4), (got, ref)

    print("KERNEL_OK")
</pallas_src>

<mosaic_0001>
module attributes {stable_mosaic.version = 11 : i64} {
  func.func @kernel(%arg0: i32, %arg1: memref<2x1024xf32, #tpu.memory_space<vmem>>, %arg2: memref<2x1024xf32, #tpu.memory_space<vmem>>, %arg3: memref<1024x128xbf16, #tpu.memory_space<vmem>>, %arg4: memref<1x128xf32, #tpu.memory_space<vmem>>, %arg5: memref<1x128xf32, #tpu.memory_space<vmem>>, %arg6: memref<1x1xf32, #tpu.memory_space<smem>>, %arg7: memref<1x128xf32, #tpu.memory_space<vmem>>, %arg8: memref<2x128xf32, #tpu.memory_space<vmem>>, %arg9: memref<2x128xf32, #tpu.memory_space<vmem>>) attributes {dimension_semantics = [#tpu.dimension_semantics<arbitrary>], iteration_bounds = array<i64: 1>, scalar_prefetch = 0 : i64, scratch_operands = 2 : i64, tpu.core_type = #tpu.core_type<tc>, window_params = [{transform_indices = @transform_0, window_bounds = array<i64: 2, 1024>}, {transform_indices = @transform_1, window_bounds = array<i64: 2, 1024>}, {transform_indices = @transform_2, window_bounds = array<i64: 1024, 128>}, {pipeline_mode = #tpu.pipeline_mode<synchronous>, transform_indices = @transform_3, window_bounds = array<i64: 1, 128>}, {pipeline_mode = #tpu.pipeline_mode<synchronous>, transform_indices = @transform_4, window_bounds = array<i64: 1, 128>}, {transform_indices = @transform_5, window_bounds = array<i64: 1, 1>}, {pipeline_mode = #tpu.pipeline_mode<synchronous>, transform_indices = @transform_6, window_bounds = array<i64: 1, 128>}]} {
    %c0_i32 = arith.constant 0 : i32
    %0 = arith.cmpi eq, %arg0, %c0_i32 : i32
    %1 = arith.extui %0 : i1 to i32
    %c0_i32_0 = arith.constant 0 : i32
    %2 = arith.cmpi ne, %1, %c0_i32_0 : i32
    scf.if %2 {
      %cst_17 = arith.constant 0.000000e+00 : f32
      %19 = vector.broadcast %cst_17 : f32 to vector<2x128xf32>
      %c0_18 = arith.constant 0 : index
      %c0_19 = arith.constant 0 : index
      %20 = vector.load %arg8[%c0_18, %c0_19] : memref<2x128xf32, #tpu.memory_space<vmem>>, vector<2x128xf32>
      tpu.vector_store %arg8[%c0_18, %c0_19], %19 {strides = array<i32>} : memref<2x128xf32, #tpu.memory_space<vmem>>, vector<2x128xf32>,
      %cst_20 = arith.constant 0.000000e+00 : f32
      %21 = vector.broadcast %cst_20 : f32 to vector<2x128xf32>
      %c0_21 = arith.constant 0 : index
      %c0_22 = arith.constant 0 : index
      %22 = vector.load %arg9[%c0_21, %c0_22] : memref<2x128xf32, #tpu.memory_space<vmem>>, vector<2x128xf32>
      tpu.vector_store %arg9[%c0_21, %c0_22], %21 {strides = array<i32>} : memref<2x128xf32, #tpu.memory_space<vmem>>, vector<2x128xf32>,
    } else {
    }
    %c0 = arith.constant 0 : index
    %c0_1 = arith.constant 0 : index
    %3 = vector.load %arg1[%c0, %c0_1] : memref<2x1024xf32, #tpu.memory_space<vmem>>, vector<2x1024xf32>
    %c0_2 = arith.constant 0 : index
    %c0_3 = arith.constant 0 : index
    %4 = vector.load %arg2[%c0_2, %c0_3] : memref<2x1024xf32, #tpu.memory_space<vmem>>, vector<2x1024xf32>
    %c0_4 = arith.constant 0 : index
    %c0_5 = arith.constant 0 : index
    %5 = vector.load %arg3[%c0_4, %c0_5] : memref<1024x128xbf16, #tpu.memory_space<vmem>>, vector<1024x128xbf16>
    %c0_6 = arith.constant 0 : index
    %c0_7 = arith.constant 0 : index
    %6 = vector.load %arg8[%c0_6, %c0_7] : memref<2x128xf32, #tpu.memory_space<vmem>>, vector<2x128xf32>
    %7 = arith.truncf %3 : vector<2x1024xf32> to vector<2x1024xbf16>
    %cst = arith.constant dense<0.000000e+00> : vector<2x128xf32>
    %8 = tpu.matmul %7, %5, %cst {dimension_numbers = #tpu.dot_dimension_numbers<[1], [0], [0], [1], [0, 0, 1, 1], [], []>} : vector<2x1024xbf16>, vector<1024x128xbf16>, vector<2x128xf32> -> vector<2x128xf32>
    %9 = arith.addf %6, %8 : vector<2x128xf32>
    %c0_8 = arith.constant 0 : index
    %c0_9 = arith.constant 0 : index
    %10 = vector.load %arg8[%c0_8, %c0_9] : memref<2x128xf32, #tpu.memory_space<vmem>>, vector<2x128xf32>
    tpu.vector_store %arg8[%c0_8, %c0_9], %9 {strides = array<i32>} : memref<2x128xf32, #tpu.memory_space<vmem>>, vector<2x128xf32>,
    %c0_10 = arith.constant 0 : index
    %c0_11 = arith.constant 0 : index
    %11 = vector.load %arg9[%c0_10, %c0_11] : memref<2x128xf32, #tpu.memory_space<vmem>>, vector<2x128xf32>
    %12 = arith.truncf %4 : vector<2x1024xf32> to vector<2x1024xbf16>
    %cst_12 = arith.constant dense<0.000000e+00> : vector<2x128xf32>
    %13 = tpu.matmul %12, %5, %cst_12 {dimension_numbers = #tpu.dot_dimension_numbers<[1], [0], [0], [1], [0, 0, 1, 1], [], []>} : vector<2x1024xbf16>, vector<1024x128xbf16>, vector<2x128xf32> -> vector<2x128xf32>
    %14 = arith.addf %11, %13 : vector<2x128xf32>
    %c0_13 = arith.constant 0 : index
    %c0_14 = arith.constant 0 : index
    %15 = vector.load %arg9[%c0_13, %c0_14] : memref<2x128xf32, #tpu.memory_space<vmem>>, vector<2x128xf32>
    tpu.vector_store %arg9[%c0_13, %c0_14], %14 {strides = array<i32>} : memref<2x128xf32, #tpu.memory_space<vmem>>, vector<2x128xf32>,
    %c0_i32_15 = arith.constant 0 : i32
    %16 = arith.cmpi eq, %arg0, %c0_i32_15 : i32
    %17 = arith.extui %16 : i1 to i32
    %c0_i32_16 = arith.constant 0 : i32
    %18 = arith.cmpi ne, %17, %c0_i32_16 : i32
    scf.if %18 {
      %c0_17 = arith.constant 0 : index
      %c0_18 = arith.constant 0 : index
      %19 = vector.load %arg4[%c0_17, %c0_18] : memref<1x128xf32, #tpu.memory_space<vmem>>, vector<1x128xf32>
      %c0_19 = arith.constant 0 : index
      %c0_20 = arith.constant 0 : index
      %20 = vector.load %arg5[%c0_19, %c0_20] : memref<1x128xf32, #tpu.memory_space<vmem>>, vector<1x128xf32>
      %c0_21 = arith.constant 0 : index
      %c0_22 = arith.constant 0 : index
      %21 = vector.load %arg8[%c0_21, %c0_22] : memref<2x128xf32, #tpu.memory_space<vmem>>, vector<2x128xf32>
      %22 = vector.broadcast %19 : vector<1x128xf32> to vector<2x128xf32>
      %23 = arith.addf %21, %22 : vector<2x128xf32>
      %c0_23 = arith.constant 0 : index
      %c0_24 = arith.constant 0 : index
      %24 = vector.load %arg9[%c0_23, %c0_24] : memref<2x128xf32, #tpu.memory_space<vmem>>, vector<2x128xf32>
      %25 = vector.broadcast %19 : vector<1x128xf32> to vector<2x128xf32>
      %26 = arith.addf %24, %25 : vector<2x128xf32>
      %cst_25 = arith.constant 0.000000e+00 : f32
      %27 = vector.broadcast %cst_25 : f32 to vector<2x128xf32>
      %28 = arith.cmpf oge, %23, %27 : vector<2x128xf32>
      %cst_26 = arith.constant 2.000000e-01 : f32
      %29 = vector.broadcast %cst_26 : f32 to vector<2x128xf32>
      %30 = arith.mulf %29, %23 : vector<2x128xf32>
      %31 = arith.select %28, %23, %30 : vector<2x128xi1>, vector<2x128xf32>
      %cst_27 = arith.constant 0.000000e+00 : f32
      %32 = vector.broadcast %cst_27 : f32 to vector<2x128xf32>
      %33 = arith.cmpf oge, %26, %32 : vector<2x128xf32>
      %cst_28 = arith.constant 2.000000e-01 : f32
      %34 = vector.broadcast %cst_28 : f32 to vector<2x128xf32>
      %35 = arith.mulf %34, %26 : vector<2x128xf32>
      %36 = arith.select %33, %26, %35 : vector<2x128xi1>, vector<2x128xf32>
      %37 = vector.broadcast %20 : vector<1x128xf32> to vector<2x128xf32>
      %38 = arith.mulf %31, %37 : vector<2x128xf32>
      %cst_29 = arith.constant dense<0.000000e+00> : vector<2xf32>
      %39 = vector.multi_reduction <add>, %38, %cst_29 [1] : vector<2x128xf32> to vector<2xf32>
      %40 = vector.shape_cast %39 : vector<2xf32> to vector<2x1xf32>
      %c0_30 = arith.constant 0 : index
      %c0_31 = arith.constant 0 : index
      %41 = memref.load %arg6[%c0_30, %c0_31] : memref<1x1xf32, #tpu.memory_space<smem>>
      %42 = vector.broadcast %41 : f32 to vector<2x1xf32>
      %43 = arith.addf %40, %42 : vector<2x1xf32>
      %44 = vector.broadcast %20 : vector<1x128xf32> to vector<2x128xf32>
      %45 = arith.mulf %36, %44 : vector<2x128xf32>
      %cst_32 = arith.constant dense<0.000000e+00> : vector<2xf32>
      %46 = vector.multi_reduction <add>, %45, %cst_32 [1] : vector<2x128xf32> to vector<2xf32>
      %47 = vector.shape_cast %46 : vector<2xf32> to vector<2x1xf32>
      %c0_33 = arith.constant 0 : index
      %c0_34 = arith.constant 0 : index
      %48 = memref.load %arg6[%c0_33, %c0_34] : memref<1x1xf32, #tpu.memory_space<smem>>
      %49 = vector.broadcast %48 : f32 to vector<2x1xf32>
      %50 = arith.addf %47, %49 : vector<2x1xf32>
      %51 = vector.shape_cast %43 : vector<2x1xf32> to vector<1x2x1xf32>
      %cst_35 = arith.constant dense<0.000000e+00> : vector<1xf32>
      %52 = vector.multi_reduction <add>, %51, %cst_35 [1, 2] : vector<1x2x1xf32> to vector<1xf32>
      %53 = vector.shape_cast %52 : vector<1xf32> to vector<1x1x1xf32>
      %54 = vector.extract %53[0, 0, 0] : f32 from vector<1x1x1xf32>
      %cst_36 = arith.constant 2.000000e+00 : f32
      %55 = arith.divf %54, %cst_36 : f32
      %56 = vector.shape_cast %50 : vector<2x1xf32> to vector<1x2x1xf32>
      %cst_37 = arith.constant dense<0.000000e+00> : vector<1xf32>
      %57 = vector.multi_reduction <add>, %56, %cst_37 [1, 2] : vector<1x2x1xf32> to vector<1xf32>
      %58 = vector.shape_cast %57 : vector<1xf32> to vector<1x1x1xf32>
      %59 = vector.extract %58[0, 0, 0] : f32 from vector<1x1x1xf32>
      %cst_38 = arith.constant 2.000000e+00 : f32
      %60 = arith.divf %59, %cst_38 : f32
      %61 = vector.broadcast %60 : f32 to vector<2x1xf32>
      %62 = arith.subf %43, %61 : vector<2x1xf32>
      %cst_39 = arith.constant 0.000000e+00 : f32
      %63 = vector.broadcast %cst_39 : f32 to vector<2x1xf32>
      %64 = arith.subf %63, %62 : vector<2x1xf32>
      %cst_40 = arith.constant 0.000000e+00 : f32
      %65 = vector.broadcast %cst_40 : f32 to vector<2x1xf32>
      %66 = arith.maximumf %64, %65 : vector<2x1xf32>
      %67 = math.absf %64 : vector<2x1xf32>
      %cst_41 = arith.constant 0.000000e+00 : f32
      %68 = vector.broadcast %cst_41 : f32 to vector<2x1xf32>
      %69 = arith.subf %68, %67 : vector<2x1xf32>
      %70 = math.exp %69 : vector<2x1xf32>
      %71 = math.log1p %70 : vector<2x1xf32>
      %72 = arith.addf %66, %71 : vector<2x1xf32>
      %73 = vector.shape_cast %72 : vector<2x1xf32> to vector<1x2x1xf32>
      %cst_42 = arith.constant dense<0.000000e+00> : vector<1xf32>
      %74 = vector.multi_reduction <add>, %73, %cst_42 [1, 2] : vector<1x2x1xf32> to vector<1xf32>
      %75 = vector.shape_cast %74 : vector<1xf32> to vector<1x1x1xf32>
      %76 = vector.extract %75[0, 0, 0] : f32 from vector<1x1x1xf32>
      %cst_43 = arith.constant 2.000000e+00 : f32
      %77 = arith.divf %76, %cst_43 : f32
      %78 = vector.broadcast %55 : f32 to vector<2x1xf32>
      %79 = arith.subf %50, %78 : vector<2x1xf32>
      %cst_44 = arith.constant 0.000000e+00 : f32
      %80 = vector.broadcast %cst_44 : f32 to vector<2x1xf32>
      %81 = arith.maximumf %79, %80 : vector<2x1xf32>
      %82 = math.absf %79 : vector<2x1xf32>
      %cst_45 = arith.constant 0.000000e+00 : f32
      %83 = vector.broadcast %cst_45 : f32 to vector<2x1xf32>
      %84 = arith.subf %83, %82 : vector<2x1xf32>
      %85 = math.exp %84 : vector<2x1xf32>
      %86 = math.log1p %85 : vector<2x1xf32>
      %87 = arith.addf %81, %86 : vector<2x1xf32>
      %88 = vector.shape_cast %87 : vector<2x1xf32> to vector<1x2x1xf32>
      %cst_46 = arith.constant dense<0.000000e+00> : vector<1xf32>
      %89 = vector.multi_reduction <add>, %88, %cst_46 [1, 2] : vector<1x2x1xf32> to vector<1xf32>
      %90 = vector.shape_cast %89 : vector<1xf32> to vector<1x1x1xf32>
      %91 = vector.extract %90[0, 0, 0] : f32 from vector<1x1x1xf32>
      %cst_47 = arith.constant 2.000000e+00 : f32
      %92 = arith.divf %91, %cst_47 : f32
      %93 = arith.addf %77, %92 : f32
      %cst_48 = arith.constant 5.000000e-01 : f32
      %94 = arith.mulf %cst_48, %93 : f32
      %95 = vector.broadcast %60 : f32 to vector<2x1xf32>
      %96 = arith.subf %43, %95 : vector<2x1xf32>
      %cst_49 = arith.constant 0.000000e+00 : f32
      %97 = vector.broadcast %cst_49 : f32 to vector<2x1xf32>
      %98 = arith.maximumf %96, %97 : vector<2x1xf32>
      %99 = math.absf %96 : vector<2x1xf32>
      %cst_50 = arith.constant 0.000000e+00 : f32
      %100 = vector.broadcast %cst_50 : f32 to vector<2x1xf32>
      %101 = arith.subf %100, %99 : vector<2x1xf32>
      %102 = math.exp %101 : vector<2x1xf32>
      %103 = math.log1p %102 : vector<2x1xf32>
      %104 = arith.addf %98, %103 : vector<2x1xf32>
      %105 = vector.shape_cast %104 : vector<2x1xf32> to vector<1x2x1xf32>
      %cst_51 = arith.constant dense<0.000000e+00> : vector<1xf32>
      %106 = vector.multi_reduction <add>, %105, %cst_51 [1, 2] : vector<1x2x1xf32> to vector<1xf32>
      %107 = vector.shape_cast %106 : vector<1xf32> to vector<1x1x1xf32>
      %108 = vector.extract %107[0, 0, 0] : f32 from vector<1x1x1xf32>
      %cst_52 = arith.constant 2.000000e+00 : f32
      %109 = arith.divf %108, %cst_52 : f32
      %110 = vector.broadcast %55 : f32 to vector<2x1xf32>
      %111 = arith.subf %50, %110 : vector<2x1xf32>
      %cst_53 = arith.constant 0.000000e+00 : f32
      %112 = vector.broadcast %cst_53 : f32 to vector<2x1xf32>
      %113 = arith.subf %112, %111 : vector<2x1xf32>
      %cst_54 = arith.constant 0.000000e+00 : f32
      %114 = vector.broadcast %cst_54 : f32 to vector<2x1xf32>
      %115 = arith.maximumf %113, %114 : vector<2x1xf32>
      %116 = math.absf %113 : vector<2x1xf32>
      %cst_55 = arith.constant 0.000000e+00 : f32
      %117 = vector.broadcast %cst_55 : f32 to vector<2x1xf32>
      %118 = arith.subf %117, %116 : vector<2x1xf32>
      %119 = math.exp %118 : vector<2x1xf32>
      %120 = math.log1p %119 : vector<2x1xf32>
      %121 = arith.addf %115, %120 : vector<2x1xf32>
      %122 = vector.shape_cast %121 : vector<2x1xf32> to vector<1x2x1xf32>
      %cst_56 = arith.constant dense<0.000000e+00> : vector<1xf32>
      %123 = vector.multi_reduction <add>, %122, %cst_56 [1, 2] : vector<1x2x1xf32> to vector<1xf32>
      %124 = vector.shape_cast %123 : vector<1xf32> to vector<1x1x1xf32>
      %125 = vector.extract %124[0, 0, 0] : f32 from vector<1x1x1xf32>
      %cst_57 = arith.constant 2.000000e+00 : f32
      %126 = arith.divf %125, %cst_57 : f32
      %127 = arith.addf %109, %126 : f32
      %cst_58 = arith.constant 5.000000e-01 : f32
      %128 = arith.mulf %cst_58, %127 : f32
      %129 = tpu.iota {dimensions = array<i32: 1>} : vector<1x128xi32>
      %c0_i32_59 = arith.constant 0 : i32
      %130 = vector.broadcast %c0_i32_59 : i32 to vector<1x128xi32>
      %131 = arith.cmpi eq, %129, %130 : vector<1x128xi32>
      %cst_60 = arith.constant 0.000000e+00 : f32
      %132 = vector.broadcast %94 : f32 to vector<1x128xf32>
      %133 = vector.broadcast %cst_60 : f32 to vector<1x128xf32>
      %134 = arith.select %131, %132, %133 : vector<1x128xi1>, vector<1x128xf32>
      %c1_i32 = arith.constant 1 : i32
      %135 = vector.broadcast %c1_i32 : i32 to vector<1x128xi32>
      %136 = arith.cmpi eq, %129, %135 : vector<1x128xi32>
      %cst_61 = arith.constant 0.000000e+00 : f32
      %137 = vector.broadcast %77 : f32 to vector<1x128xf32>
      %138 = vector.broadcast %cst_61 : f32 to vector<1x128xf32>
      %139 = arith.select %136, %137, %138 : vector<1x128xi1>, vector<1x128xf32>
      %140 = arith.addf %134, %139 : vector<1x128xf32>
      %c2_i32 = arith.constant 2 : i32
      %141 = vector.broadcast %c2_i32 : i32 to vector<1x128xi32>
      %142 = arith.cmpi eq, %129, %141 : vector<1x128xi32>
      %cst_62 = arith.constant 0.000000e+00 : f32
      %143 = vector.broadcast %92 : f32 to vector<1x128xf32>
      %144 = vector.broadcast %cst_62 : f32 to vector<1x128xf32>
      %145 = arith.select %142, %143, %144 : vector<1x128xi1>, vector<1x128xf32>
      %146 = arith.addf %140, %145 : vector<1x128xf32>
      %c3_i32 = arith.constant 3 : i32
      %147 = vector.broadcast %c3_i32 : i32 to vector<1x128xi32>
      %148 = arith.cmpi eq, %129, %147 : vector<1x128xi32>
      %cst_63 = arith.constant 0.000000e+00 : f32
      %149 = vector.broadcast %55 : f32 to vector<1x128xf32>
      %150 = vector.broadcast %cst_63 : f32 to vector<1x128xf32>
      %151 = arith.select %148, %149, %150 : vector<1x128xi1>, vector<1x128xf32>
      %152 = arith.addf %146, %151 : vector<1x128xf32>
      %c4_i32 = arith.constant 4 : i32
      %153 = vector.broadcast %c4_i32 : i32 to vector<1x128xi32>
      %154 = arith.cmpi eq, %129, %153 : vector<1x128xi32>
      %cst_64 = arith.constant 0.000000e+00 : f32
      %155 = vector.broadcast %60 : f32 to vector<1x128xf32>
      %156 = vector.broadcast %cst_64 : f32 to vector<1x128xf32>
      %157 = arith.select %154, %155, %156 : vector<1x128xi1>, vector<1x128xf32>
      %158 = arith.addf %152, %157 : vector<1x128xf32>
      %c5_i32 = arith.constant 5 : i32
      %159 = vector.broadcast %c5_i32 : i32 to vector<1x128xi32>
      %160 = arith.cmpi eq, %129, %159 : vector<1x128xi32>
      %cst_65 = arith.constant 0.000000e+00 : f32
      %161 = vector.broadcast %128 : f32 to vector<1x128xf32>
      %162 = vector.broadcast %cst_65 : f32 to vector<1x128xf32>
      %163 = arith.select %160, %161, %162 : vector<1x128xi1>, vector<1x128xf32>
      %164 = arith.addf %158, %163 : vector<1x128xf32>
      %c0_66 = arith.constant 0 : index
      %c0_67 = arith.constant 0 : index
      %165 = vector.load %arg7[%c0_66, %c0_67] : memref<1x128xf32, #tpu.memory_space<vmem>>, vector<1x128xf32>
      tpu.vector_store %arg7[%c0_66, %c0_67], %164 {strides = array<i32>} : memref<1x128xf32, #tpu.memory_space<vmem>>, vector<1x128xf32>,
    } else {
    }
    return
  }
  func.func @transform_0(%arg0: i32) -> (i32, i32) {
    %c0_i32 = arith.constant 0 : i32
    %c0_i32_0 = arith.constant 0 : i32
    return %c0_i32, %arg0 : i32, i32
  }
  func.func @transform_1(%arg0: i32) -> (i32, i32) {
    %c0_i32 = arith.constant 0 : i32
    %c0_i32_0 = arith.constant 0 : i32
    return %c0_i32, %arg0 : i32, i32
  }
  func.func @transform_2(%arg0: i32) -> (i32, i32) {
    %c0_i32 = arith.constant 0 : i32
    %c0_i32_0 = arith.constant 0 : i32
    return %arg0, %c0_i32 : i32, i32
  }
  func.func @transform_3(%arg0: i32) -> (i32, i32) {
    %c0_i32 = arith.constant 0 : i32
    %c0_i32_0 = arith.constant 0 : i32
    %c0_i32_1 = arith.constant 0 : i32
    return %c0_i32, %c0_i32_0 : i32, i32
  }
  func.func @transform_4(%arg0: i32) -> (i32, i32) {
    %c0_i32 = arith.constant 0 : i32
    %c0_i32_0 = arith.constant 0 : i32
    %c0_i32_1 = arith.constant 0 : i32
    return %c0_i32, %c0_i32_0 : i32, i32
  }
  func.func @transform_5(%arg0: i32) -> (i32, i32) {
    %c0_i32 = arith.constant 0 : i32
    %c0_i32_0 = arith.constant 0 : i32
    %c0_i32_1 = arith.constant 0 : i32
    return %c0_i32, %c0_i32_0 : i32, i32
  }
  func.func @transform_6(%arg0: i32) -> (i32, i32) {
    %c0_i32 = arith.constant 0 : i32
    %c0_i32_0 = arith.constant 0 : i32
    %c0_i32_1 = arith.constant 0 : i32
    return %c0_i32, %c0_i32_0 : i32, i32
  }
}

</mosaic_0001>

<llo_original>
// kernel: adversarial_losses.1
$region0: #{adversarial_losses.1}
  #allocation0 [shape = 'u32[]', space=smem, size = 0x4, offset = 0x4, fixed_abs, tag = 'smem constant byte address 0x4 - core index']
  #allocation1 [shape = 'u32[144,128]{1,0:T(1,128)}', space=vmem, size = 0x12000, scoped, tag = 'internal scratch']
  #allocation2 [shape = 'f32[2,128]{1,0:T(2,128)}', space=vmem, size = 0x400, scoped, tag = 'scratch operand']
  #allocation3 [shape = 'f32[2,128]{1,0:T(2,128)}', space=vmem, size = 0x400, scoped, tag = 'scratch operand']
  #allocation4 [shape = 'f32[1,1]{1,0:T(1,128)S(6)}', space=smem, size = 0x200, scoped, tag = 'scoped memory for adversarial_losses.1']
  %s0 = inlined_call_operand.vmem [shape: f32[2,1024], index: 0, kind: input, shape index: {}]
  %s1 = inlined_call_operand.vmem [shape: f32[2,1024], index: 1, kind: input, shape index: {}]
  %s2 = inlined_call_operand.hbm [shape: bf16[1024,128], index: 2, kind: input, shape index: {}]
  %s3 = inlined_call_operand.vmem [shape: f32[1,128], index: 3, kind: input, shape index: {}]
  %s4 = inlined_call_operand.vmem [shape: f32[1,128], index: 4, kind: input, shape index: {}]
  %s5 = inlined_call_operand.<no memory space> [shape: f32[1,1], index: 5, kind: input, shape index: {}]
  %s6 = inlined_call_operand.vmem [shape: f32[1,128], index: 6, kind: output, shape index: {}]
  %s7 = sld [smem:[#allocation0]]
  $region46: #{adversarial_losses.1} parent=0
    _
  %s9 = ssub.s32 1, %s7
  %s10 = scalar_select 0, %s9, %s7
  %11 = sst [smem:[#allocation4]] %s5
  $region1: #{adversarial_losses.1} parent=0
    #allocation5 [shape = 'u8[262144]{0}', space=vmem, size = 0x40000, scoped, tag = 'input window, operand 2, single buffered']
    #allocation6 [shape = 's32[1]{0}', space=sflag, size = 0x4, scoped, tag = 'scoped memory for adversarial_losses.1']
    %12 = vsyncpa [#allocation6], 0
    // Predicated region
    $region2: #{adversarial_losses.1} parent=1 // pred_check
      _
    $region3: #{adversarial_losses.1} parent=1 // pred_check_branch
      %14 = sbr.rel (0) target = $region5
    $region4: #{adversarial_losses.1} parent=1 // pred_region
      _
    $region5: #{adversarial_losses.1} parent=1 // pred_fallthru
      _
    // Predicated region
    $region6: #{adversarial_losses.1} parent=1 // pred_check
      _
    $region7: #{adversarial_losses.1} parent=1 // pred_check_branch
      %16 = sbr.rel (0) target = $region9
    $region8: #{adversarial_losses.1} parent=1 // pred_region
      _
    $region9: #{adversarial_losses.1} parent=1 // pred_fallthru
      _
    // Predicated region
    $region10: #{adversarial_losses.1} parent=1 // pred_check
      _
    $region11: #{adversarial_losses.1} parent=1 // pred_check_branch
      %18 = sbr.rel (0) target = $region13
    $region12: #{adversarial_losses.1} parent=1 // pred_region
      %s20 = ssub.s32 8192, 8192
      %21 = vsyncadd [#allocation6], %s20
      %s22 = sshll.u32 [#allocation5], 4
      %s23 = int_to_ptr.vmem [resolvable:$true] %s22
      %28 = dma.hbm_to_vmem [thread:$0]  %s2, 8192, %s23, [#allocation6], 64, 64, 4
    $region13: #{adversarial_losses.1} parent=1 // pred_fallthru
      _
    // Predicated region
    $region14: #{adversarial_losses.1} parent=1 // pred_check
      _
    $region15: #{adversarial_losses.1} parent=1 // pred_check_branch
      %30 = sbr.rel (0) target = $region17
    $region16: #{adversarial_losses.1} parent=1 // pred_region
      _
    $region17: #{adversarial_losses.1} parent=1 // pred_fallthru
      _
    // Predicated region
    $region18: #{adversarial_losses.1} parent=1 // pred_check
      _
    $region19: #{adversarial_losses.1} parent=1 // pred_check_branch
      %32 = sbr.rel (0) target = $region21
    $region20: #{adversarial_losses.1} parent=1 // pred_region
      _
    $region21: #{adversarial_losses.1} parent=1 // pred_fallthru
      _
    // Predicated region
    $region22: #{adversarial_losses.1} parent=1 // pred_check
      _
    $region23: #{adversarial_losses.1} parent=1 // pred_check_branch
      %34 = sbr.rel (0) target = $region25
    $region24: #{adversarial_losses.1} parent=1 // pred_region
      _
    $region25: #{adversarial_losses.1} parent=1 // pred_fallthru
      _
    // Predicated region
    $region26: #{adversarial_losses.1} parent=1 // pred_check
      _
    $region27: #{adversarial_losses.1} parent=1 // pred_check_branch
      %36 = sbr.rel (0) target = $region29
    $region28: #{adversarial_losses.1} parent=1 // pred_region
      %37 = dma.done [#allocation6], 8192
    $region29: #{adversarial_losses.1} parent=1 // pred_fallthru
      _
    %p39 = scmp.eq.s32.totalorder 0, 0
    // Predicated region
    $region30: #{adversarial_losses.1} parent=1 // pred_check
      %p40 = pneg %p39
    $region31: #{adversarial_losses.1} parent=1 // pred_check_branch
      %42 = sbr.rel (%p40) target = $region33
    $region32: #{adversarial_losses.1} parent=1 // pred_region
      %43 = vst [vmem:[#allocation2] sm:$0x3] 0.0
      %44 = vst [vmem:[#allocation3] sm:$0x3] 0.0
    $region33: #{adversarial_losses.1} parent=1 // pred_fallthru
      _
    %v45 = vld [vmem:[%s0] sm:$0xff]
    %v46 = vld [vmem:[%s0 + $0x8] sm:$0xff]
    %v47 = vld [vmem:[%s1] sm:$0xff]
    %v48 = vld [vmem:[%s1 + $0x8] sm:$0xff]
    %v49 = vld [vmem:[#allocation5] sm:$0xf]
    %v50 = vld [vmem:[#allocation5 + $0x4] sm:$0xf]
    %v51 = vld [vmem:[#allocation5 + $0x8] sm:$0xf]
    %v52 = vld [vmem:[#allocation5 + $0xc] sm:$0xf]
    %v53 = vld [vmem:[#allocation5 + $0x10] sm:$0xf]
    %v54 = vld [vmem:[#allocation5 + $0x14] sm:$0xf]
    %v55 = vld [vmem:[#allocation5 + $0x18] sm:$0xf]
    %v56 = vld [vmem:[#allocation5 + $0x1c] sm:$0xf]
    %v57 = vld [vmem:[#allocation5 + $0x20] sm:$0xf]
    %v58 = vld [vmem:[#allocation5 + $0x24] sm:$0xf]
    %v59 = vld [vmem:[#allocation5 + $0x28] sm:$0xf]
    %v60 = vld [vmem:[#allocation5 + $0x2c] sm:$0xf]
    %v61 = vld [vmem:[#allocation5 + $0x30] sm:$0xf]
    %v62 = vld [vmem:[#allocation5 + $0x34] sm:$0xf]
    %v63 = vld [vmem:[#allocation5 + $0x38] sm:$0xf]
    %v64 = vld [vmem:[#allocation5 + $0x3c] sm:$0xf]
    %v65 = vld [vmem:[#allocation5 + $0x40] sm:$0xf]
    %v66 = vld [vmem:[#allocation5 + $0x44] sm:$0xf]
    %v67 = vld [vmem:[#allocation5 + $0x48] sm:$0xf]
    %v68 = vld [vmem:[#allocation5 + $0x4c] sm:$0xf]
    %v69 = vld [vmem:[#allocation5 + $0x50] sm:$0xf]
    %v70 = vld [vmem:[#allocation5 + $0x54] sm:$0xf]
    %v71 = vld [vmem:[#allocation5 + $0x58] sm:$0xf]
    %v72 = vld [vmem:[#allocation5 + $0x5c] sm:$0xf]
    %v73 = vld [vmem:[#allocation5 + $0x60] sm:$0xf]
    %v74 = vld [vmem:[#allocation5 + $0x64] sm:$0xf]
    %v75 = vld [vmem:[#allocation5 + $0x68] sm:$0xf]
    %v76 = vld [vmem:[#allocation5 + $0x6c] sm:$0xf]
    %v77 = vld [vmem:[#allocation5 + $0x70] sm:$0xf]
    %v78 = vld [vmem:[#allocation5 + $0x74] sm:$0xf]
    %v79 = vld [vmem:[#allocation5 + $0x78] sm:$0xf]
    %v80 = vld [vmem:[#allocation5 + $0x7c] sm:$0xf]
    %v81 = vld [vmem:[#allocation5 + $0x80] sm:$0xf]
    %v82 = vld [vmem:[#allocation5 + $0x84] sm:$0xf]
    %v83 = vld [vmem:[#allocation5 + $0x88] sm:$0xf]
    %v84 = vld [vmem:[#allocation5 + $0x8c] sm:$0xf]
    %v85 = vld [vmem:[#allocation5 + $0x90] sm:$0xf]
    %v86 = vld [vmem:[#allocation5 + $0x94] sm:$0xf]
    %v87 = vld [vmem:[#allocation5 + $0x98] sm:$0xf]
    %v88 = vld [vmem:[#allocation5 + $0x9c] sm:$0xf]
    %v89 = vld [vmem:[#allocation5 + $0xa0] sm:$0xf]
    %v90 = vld [vmem:[#allocation5 + $0xa4] sm:$0xf]
    %v91 = vld [vmem:[#allocation5 + $0xa8] sm:$0xf]
    %v92 = vld [vmem:[#allocation5 + $0xac] sm:$0xf]
    %v93 = vld [vmem:[#allocation5 + $0xb0] sm:$0xf]
    %v94 = vld [vmem:[#allocation5 + $0xb4] sm:$0xf]
    %v95 = vld [vmem:[#allocation5 + $0xb8] sm:$0xf]
    %v96 = vld [vmem:[#allocation5 + $0xbc] sm:$0xf]
    %v97 = vld [vmem:[#allocation5 + $0xc0] sm:$0xf]
    %v98 = vld [vmem:[#allocation5 + $0xc4] sm:$0xf]
    %v99 = vld [vmem:[#allocation5 + $0xc8] sm:$0xf]
    %v100 = vld [vmem:[#allocation5 + $0xcc] sm:$0xf]
    %v101 = vld [vmem:[#allocation5 + $0xd0] sm:$0xf]
    %v102 = vld [vmem:[#allocation5 + $0xd4] sm:$0xf]
    %v103 = vld [vmem:[#allocation5 + $0xd8] sm:$0xf]
    %v104 = vld [vmem:[#allocation5 + $0xdc] sm:$0xf]
    %v105 = vld [vmem:[#allocation5 + $0xe0] sm:$0xf]
    %v106 = vld [vmem:[#allocation5 + $0xe4] sm:$0xf]
    %v107 = vld [vmem:[#allocation5 + $0xe8] sm:$0xf]
    %v108 = vld [vmem:[#allocation5 + $0xec] sm:$0xf]
    %v109 = vld [vmem:[#allocation5 + $0xf0] sm:$0xf]
    %v110 = vld [vmem:[#allocation5 + $0xf4] sm:$0xf]
    %v111 = vld [vmem:[#allocation5 + $0xf8] sm:$0xf]
    %v112 = vld [vmem:[#allocation5 + $0xfc] sm:$0xf]
    %v113 = vld [vmem:[#allocation5 + $0x100] sm:$0xf]
    %v114 = vld [vmem:[#allocation5 + $0x104] sm:$0xf]
    %v115 = vld [vmem:[#allocation5 + $0x108] sm:$0xf]
    %v116 = vld [vmem:[#allocation5 + $0x10c] sm:$0xf]
    %v117 = vld [vmem:[#allocation5 + $0x110] sm:$0xf]
    %v118 = vld [vmem:[#allocation5 + $0x114] sm:$0xf]
    %v119 = vld [vmem:[#allocation5 + $0x118] sm:$0xf]
    %v120 = vld [vmem:[#allocation5 + $0x11c] sm:$0xf]
    %v121 = vld [vmem:[#allocation5 + $0x120] sm:$0xf]
    %v122 = vld [vmem:[#allocation5 + $0x124] sm:$0xf]
    %v123 = vld [vmem:[#allocation5 + $0x128] sm:$0xf]
    %v124 = vld [vmem:[#allocation5 + $0x12c] sm:$0xf]
    %v125 = vld [vmem:[#allocation5 + $0x130] sm:$0xf]
    %v126 = vld [vmem:[#allocation5 + $0x134] sm:$0xf]
    %v127 = vld [vmem:[#allocation5 + $0x138] sm:$0xf]
    %v128 = vld [vmem:[#allocation5 + $0x13c] sm:$0xf]
    %v129 = vld [vmem:[#allocation5 + $0x140] sm:$0xf]
    %v130 = vld [vmem:[#allocation5 + $0x144] sm:$0xf]
    %v131 = vld [vmem:[#allocation5 + $0x148] sm:$0xf]
    %v132 = vld [vmem:[#allocation5 + $0x14c] sm:$0xf]
    %v133 = vld [vmem:[#allocation5 + $0x150] sm:$0xf]
    %v134 = vld [vmem:[#allocation5 + $0x154] sm:$0xf]
    %v135 = vld [vmem:[#allocation5 + $0x158] sm:$0xf]
    %v136 = vld [vmem:[#allocation5 + $0x15c] sm:$0xf]
    %v137 = vld [vmem:[#allocation5 + $0x160] sm:$0xf]
    %v138 = vld [vmem:[#allocation5 + $0x164] sm:$0xf]
    %v139 = vld [vmem:[#allocation5 + $0x168] sm:$0xf]
    %v140 = vld [vmem:[#allocation5 + $0x16c] sm:$0xf]
    %v141 = vld [vmem:[#allocation5 + $0x170] sm:$0xf]
    %v142 = vld [vmem:[#allocation5 + $0x174] sm:$0xf]
    %v143 = vld [vmem:[#allocation5 + $0x178] sm:$0xf]
    %v144 = vld [vmem:[#allocation5 + $0x17c] sm:$0xf]
    %v145 = vld [vmem:[#allocation5 + $0x180] sm:$0xf]
    %v146 = vld [vmem:[#allocation5 + $0x184] sm:$0xf]
    %v147 = vld [vmem:[#allocation5 + $0x188] sm:$0xf]
    %v148 = vld [vmem:[#allocation5 + $0x18c] sm:$0xf]
    %v149 = vld [vmem:[#allocation5 + $0x190] sm:$0xf]
    %v150 = vld [vmem:[#allocation5 + $0x194] sm:$0xf]
    %v151 = vld [vmem:[#allocation5 + $0x198] sm:$0xf]
    %v152 = vld [vmem:[#allocation5 + $0x19c] sm:$0xf]
    %v153 = vld [vmem:[#allocation5 + $0x1a0] sm:$0xf]
    %v154 = vld [vmem:[#allocation5 + $0x1a4] sm:$0xf]
    %v155 = vld [vmem:[#allocation5 + $0x1a8] sm:$0xf]
    %v156 = vld [vmem:[#allocation5 + $0x1ac] sm:$0xf]
    %v157 = vld [vmem:[#allocation5 + $0x1b0] sm:$0xf]
    %v158 = vld [vmem:[#allocation5 + $0x1b4] sm:$0xf]
    %v159 = vld [vmem:[#allocation5 + $0x1b8] sm:$0xf]
    %v160 = vld [vmem:[#allocation5 + $0x1bc] sm:$0xf]
    %v161 = vld [vmem:[#allocation5 + $0x1c0] sm:$0xf]
    %v162 = vld [vmem:[#allocation5 + $0x1c4] sm:$0xf]
    %v163 = vld [vmem:[#allocation5 + $0x1c8] sm:$0xf]
    %v164 = vld [vmem:[#allocation5 + $0x1cc] sm:$0xf]
    %v165 = vld [vmem:[#allocation5 + $0x1d0] sm:$0xf]
    %v166 = vld [vmem:[#allocation5 + $0x1d4] sm:$0xf]
    %v167 = vld [vmem:[#allocation5 + $0x1d8] sm:$0xf]
    %v168 = vld [vmem:[#allocation5 + $0x1dc] sm:$0xf]
    %v169 = vld [vmem:[#allocation5 + $0x1e0] sm:$0xf]
    %v170 = vld [vmem:[#allocation5 + $0x1e4] sm:$0xf]
    %v171 = vld [vmem:[#allocation5 + $0x1e8] sm:$0xf]
    %v172 = vld [vmem:[#allocation5 + $0x1ec] sm:$0xf]
    %v173 = vld [vmem:[#allocation5 + $0x1f0] sm:$0xf]
    %v174 = vld [vmem:[#allocation5 + $0x1f4] sm:$0xf]
    %v175 = vld [vmem:[#allocation5 + $0x1f8] sm:$0xf]
    %v176 = vld [vmem:[#allocation5 + $0x1fc] sm:$0xf]
    %v177 = vld [vmem:[#allocation2] sm:$0x3]
    %v180 = vcombine.high %v45, %v45
    %v182 = vunpack.c.l.s4 1983009808
    %v183 = vunpack.c.0.s8 %v182
    %v184 = vlaneseq
    %v185 = vshrl.u32 %v184, 7
    %v186 = vsub.s32 %v183, %v185
    %v187 = vrot.slane %v45, %v186
    %v189 = vunpack.c.l.s4 1983009808
    %v190 = vunpack.c.0.s8 %v189
    %v191 = vlaneseq
    %v192 = vshrl.u32 %v191, 7
    %v193 = vsub.s32 %v190, %v192
    %v194 = vrot.slane %v180, %v193
    %v195 = vcombine.high %v187, %v187
    %v196 = vcombine.high %v194, %v194
    %v197 = vcombine.high %v46, %v46
    %v199 = vunpack.c.l.s4 1983009808
    %v200 = vunpack.c.0.s8 %v199
    %v201 = vlaneseq
    %v202 = vshrl.u32 %v201, 7
    %v203 = vsub.s32 %v200, %v202
    %v204 = vrot.slane %v46, %v203
    %v206 = vunpack.c.l.s4 1983009808
    %v207 = vunpack.c.0.s8 %v206
    %v208 = vlaneseq
    %v209 = vshrl.u32 %v208, 7
    %v210 = vsub.s32 %v207, %v209
    %v211 = vrot.slane %v197, %v210
    %v212 = vcombine.high %v204, %v204
    %v213 = vcombine.high %v211, %v211
    %v222 = vpack.c.bf16 %v187, %v187
    %v223 = vpack.c.bf16 %v195, %v195
    %v224 = vpack.c.bf16 %v194, %v194
    %v225 = vpack.c.bf16 %v196, %v196
    %v226 = vpack.c.bf16 %v204, %v204
    %v227 = vpack.c.bf16 %v212, %v212
    %v228 = vpack.c.bf16 %v211, %v211
    %v229 = vpack.c.bf16 %v213, %v213
    %v358 = vunpack.c.l.b16 %v49
    %v359 = vunpack.c.l.b16 %v50
    %v360 = vunpack.c.l.b16 %v51
    %v361 = vunpack.c.l.b16 %v52
    %v362 = vunpack.c.l.b16 %v53
    %v363 = vunpack.c.l.b16 %v54
    %v364 = vunpack.c.l.b16 %v55
    %v365 = vunpack.c.l.b16 %v56
    %v366 = vunpack.c.l.b16 %v57
    %v367 = vunpack.c.l.b16 %v58
    %v368 = vunpack.c.l.b16 %v59
    %v369 = vunpack.c.l.b16 %v60
    %v370 = vunpack.c.l.b16 %v61
    %v371 = vunpack.c.l.b16 %v62
    %v372 = vunpack.c.l.b16 %v63
    %v373 = vunpack.c.l.b16 %v64
    %v374 = vunpack.c.l.b16 %v65
    %v375 = vunpack.c.l.b16 %v66
    %v376 = vunpack.c.l.b16 %v67
    %v377 = vunpack.c.l.b16 %v68
    %v378 = vunpack.c.l.b16 %v69
    %v379 = vunpack.c.l.b16 %v70
    %v380 = vunpack.c.l.b16 %v71
    %v381 = vunpack.c.l.b16 %v72
    %v382 = vunpack.c.l.b16 %v73
    %v383 = vunpack.c.l.b16 %v74
    %v384 = vunpack.c.l.b16 %v75
    %v385 = vunpack.c.l.b16 %v76
    %v386 = vunpack.c.l.b16 %v77
    %v387 = vunpack.c.l.b16 %v78
    %v388 = vunpack.c.l.b16 %v79
    %v389 = vunpack.c.l.b16 %v80
    %v390 = vunpack.c.l.b16 %v81
    %v391 = vunpack.c.l.b16 %v82
    %v392 = vunpack.c.l.b16 %v83
    %v393 = vunpack.c.l.b16 %v84
    %v394 = vunpack.c.l.b16 %v85
    %v395 = vunpack.c.l.b16 %v86
    %v396 = vunpack.c.l.b16 %v87
    %v397 = vunpack.c.l.b16 %v88
    %v398 = vunpack.c.l.b16 %v89
    %v399 = vunpack.c.l.b16 %v90
    %v400 = vunpack.c.l.b16 %v91
    %v401 = vunpack.c.l.b16 %v92
    %v402 = vunpack.c.l.b16 %v93
    %v403 = vunpack.c.l.b16 %v94
    %v404 = vunpack.c.l.b16 %v95
    %v405 = vunpack.c.l.b16 %v96
    %v406 = vunpack.c.l.b16 %v97
    %v407 = vunpack.c.l.b16 %v98
    %v408 = vunpack.c.l.b16 %v99
    %v409 = vunpack.c.l.b16 %v100
    %v410 = vunpack.c.l.b16 %v101
    %v411 = vunpack.c.l.b16 %v102
    %v412 = vunpack.c.l.b16 %v103
    %v413 = vunpack.c.l.b16 %v104
    %v414 = vunpack.c.l.b16 %v105
    %v415 = vunpack.c.l.b16 %v106
    %v416 = vunpack.c.l.b16 %v107
    %v417 = vunpack.c.l.b16 %v108
    %v418 = vunpack.c.l.b16 %v109
    %v419 = vunpack.c.l.b16 %v110
    %v420 = vunpack.c.l.b16 %v111
    %v421 = vunpack.c.l.b16 %v112
    %v422 = vunpack.c.l.b16 %v113
    %v423 = vunpack.c.l.b16 %v114
    %v424 = vunpack.c.l.b16 %v115
    %v425 = vunpack.c.l.b16 %v116
    %v426 = vunpack.c.l.b16 %v117
    %v427 = vunpack.c.l.b16 %v118
    %v428 = vunpack.c.l.b16 %v119
    %v429 = vunpack.c.l.b16 %v120
    %v430 = vunpack.c.l.b16 %v121
    %v431 = vunpack.c.l.b16 %v122
    %v432 = vunpack.c.l.b16 %v123
    %v433 = vunpack.c.l.b16 %v124
    %v434 = vunpack.c.l.b16 %v125
    %v435 = vunpack.c.l.b16 %v126
    %v436 = vunpack.c.l.b16 %v127
    %v437 = vunpack.c.l.b16 %v128
    %v438 = vunpack.c.l.b16 %v129
    %v439 = vunpack.c.l.b16 %v130
    %v440 = vunpack.c.l.b16 %v131
    %v441 = vunpack.c.l.b16 %v132
    %v442 = vunpack.c.l.b16 %v133
    %v443 = vunpack.c.l.b16 %v134
    %v444 = vunpack.c.l.b16 %v135
    %v445 = vunpack.c.l.b16 %v136
    %v446 = vunpack.c.l.b16 %v137
    %v447 = vunpack.c.l.b16 %v138
    %v448 = vunpack.c.l.b16 %v139
    %v449 = vunpack.c.l.b16 %v140
    %v450 = vunpack.c.l.b16 %v141
    %v451 = vunpack.c.l.b16 %v142
    %v452 = vunpack.c.l.b16 %v143
    %v453 = vunpack.c.l.b16 %v144
    %v454 = vunpack.c.l.b16 %v145
    %v455 = vunpack.c.l.b16 %v146
    %v456 = vunpack.c.l.b16 %v147
    %v457 = vunpack.c.l.b16 %v148
    %v458 = vunpack.c.l.b16 %v149
    %v459 = vunpack.c.l.b16 %v150
    %v460 = vunpack.c.l.b16 %v151
    %v461 = vunpack.c.l.b16 %v152
    %v462 = vunpack.c.l.b16 %v153
    %v463 = vunpack.c.l.b16 %v154
    %v464 = vunpack.c.l.b16 %v155
    %v465 = vunpack.c.l.b16 %v156
    %v466 = vunpack.c.l.b16 %v157
    %v467 = vunpack.c.l.b16 %v158
    %v468 = vunpack.c.l.b16 %v159
    %v469 = vunpack.c.l.b16 %v160
    %v470 = vunpack.c.l.b16 %v161
    %v471 = vunpack.c.l.b16 %v162
    %v472 = vunpack.c.l.b16 %v163
    %v473 = vunpack.c.l.b16 %v164
    %v474 = vunpack.c.l.b16 %v165
    %v475 = vunpack.c.l.b16 %v166
    %v476 = vunpack.c.l.b16 %v167
    %v477 = vunpack.c.l.b16 %v168
    %v478 = vunpack.c.l.b16 %v169
    %v479 = vunpack.c.l.b16 %v170
    %v480 = vunpack.c.l.b16 %v171
    %v481 = vunpack.c.l.b16 %v172
    %v482 = vunpack.c.l.b16 %v173
    %v483 = vunpack.c.l.b16 %v174
    %v484 = vunpack.c.l.b16 %v175
    %v485 = vunpack.c.l.b16 %v176
    %v486 = vpack.c.b16 %v359, %v358
    %v487 = vpack.c.b16 %v361, %v360
    %v488 = vpack.c.b16 %v363, %v362
    %v489 = vpack.c.b16 %v365, %v364
    %v490 = vpack.c.b16 %v367, %v366
    %v491 = vpack.c.b16 %v369, %v368
    %v492 = vpack.c.b16 %v371, %v370
    %v493 = vpack.c.b16 %v373, %v372
    %v494 = vpack.c.b16 %v375, %v374
    %v495 = vpack.c.b16 %v377, %v376
    %v496 = vpack.c.b16 %v379, %v378
    %v497 = vpack.c.b16 %v381, %v380
    %v498 = vpack.c.b16 %v383, %v382
    %v499 = vpack.c.b16 %v385, %v384
    %v500 = vpack.c.b16 %v387, %v386
    %v501 = vpack.c.b16 %v389, %v388
    %v502 = vpack.c.b16 %v391, %v390
    %v503 = vpack.c.b16 %v393, %v392
    %v504 = vpack.c.b16 %v395, %v394
    %v505 = vpack.c.b16 %v397, %v396
    %v506 = vpack.c.b16 %v399, %v398
    %v507 = vpack.c.b16 %v401, %v400
    %v508 = vpack.c.b16 %v403, %v402
    %v509 = vpack.c.b16 %v405, %v404
    %v510 = vpack.c.b16 %v407, %v406
    %v511 = vpack.c.b16 %v409, %v408
    %v512 = vpack.c.b16 %v411, %v410
    %v513 = vpack.c.b16 %v413, %v412
    %v514 = vpack.c.b16 %v415, %v414
    %v515 = vpack.c.b16 %v417, %v416
    %v516 = vpack.c.b16 %v419, %v418
    %v517 = vpack.c.b16 %v421, %v420
    %v518 = vpack.c.b16 %v423, %v422
    %v519 = vpack.c.b16 %v425, %v424
    %v520 = vpack.c.b16 %v427, %v426
    %v521 = vpack.c.b16 %v429, %v428
    %v522 = vpack.c.b16 %v431, %v430
    %v523 = vpack.c.b16 %v433, %v432
    %v524 = vpack.c.b16 %v435, %v434
    %v525 = vpack.c.b16 %v437, %v436
    %v526 = vpack.c.b16 %v439, %v438
    %v527 = vpack.c.b16 %v441, %v440
    %v528 = vpack.c.b16 %v443, %v442
    %v529 = vpack.c.b16 %v445, %v444
    %v530 = vpack.c.b16 %v447, %v446
    %v531 = vpack.c.b16 %v449, %v448
    %v532 = vpack.c.b16 %v451, %v450
    %v533 = vpack.c.b16 %v453, %v452
    %v534 = vpack.c.b16 %v455, %v454
    %v535 = vpack.c.b16 %v457, %v456
    %v536 = vpack.c.b16 %v459, %v458
    %v537 = vpack.c.b16 %v461, %v460
    %v538 = vpack.c.b16 %v463, %v462
    %v539 = vpack.c.b16 %v465, %v464
    %v540 = vpack.c.b16 %v467, %v466
    %v541 = vpack.c.b16 %v469, %v468
    %v542 = vpack.c.b16 %v471, %v470
    %v543 = vpack.c.b16 %v473, %v472
    %v544 = vpack.c.b16 %v475, %v474
    %v545 = vpack.c.b16 %v477, %v476
    %v546 = vpack.c.b16 %v479, %v478
    %v547 = vpack.c.b16 %v481, %v480
    %v548 = vpack.c.b16 %v483, %v482
    %v549 = vpack.c.b16 %v485, %v484
    %614 = vmatprep.subr.bf16.mxu0 0
    %615 = vmatpush1.bf16.msra.mxu0 %v486
    %616 = vmatprep.subr.bf16.mxu0 0
    %617 = vmatpush1.bf16.msra.mxu0 %v487
    %618 = vmatprep.subr.bf16.mxu0 0
    %619 = vmatpush1.bf16.msra.mxu0 %v488
    %620 = vmatprep.subr.bf16.mxu0 0
    %621 = vmatpush1.bf16.msra.mxu0 %v489
    %622 = vmatprep.subr.bf16.mxu0 0
    %623 = vmatpush1.bf16.msra.mxu0 %v490
    %624 = vmatprep.subr.bf16.mxu0 0
    %625 = vmatpush1.bf16.msra.mxu0 %v491
    %626 = vmatprep.subr.bf16.mxu0 0
    %627 = vmatpush1.bf16.msra.mxu0 %v492
    %628 = vmatprep.subr.bf16.mxu0 0
    %629 = vmatpush1.bf16.msra.mxu0 %v493
    %630 = vmatprep.subr.bf16.mxu0 0
    %631 = vmatpush1.bf16.msra.mxu0 %v494
    %632 = vmatprep.subr.bf16.mxu0 0
    %633 = vmatpush1.bf16.msra.mxu0 %v495
    %634 = vmatprep.subr.bf16.mxu0 0
    %635 = vmatpush1.bf16.msra.mxu0 %v496
    %636 = vmatprep.subr.bf16.mxu0 0
    %637 = vmatpush1.bf16.msra.mxu0 %v497
    %638 = vmatprep.subr.bf16.mxu0 0
    %639 = vmatpush1.bf16.msra.mxu0 %v498
    %640 = vmatprep.subr.bf16.mxu0 0
    %641 = vmatpush1.bf16.msra.mxu0 %v499
    %642 = vmatprep.subr.bf16.mxu0 0
    %643 = vmatpush1.bf16.msra.mxu0 %v500
    %644 = vmatprep.subr.bf16.mxu0 0
    %645 = vmatpush1.bf16.msra.mxu0 %v501
    %646 = vmatprep.mubr.bf16.mxu0 %v223
    %647 = vmatmul.mubr.bf16.gmra.mrb[0].mxu0 %v222
    %v648 = vpop.f32.mrb[0].mxu0
    %v649 = vadd.f32 0.0, %v648
    %v650 = vpop.f32.mrb[0].mxu0
    %v651 = vpop.f32.mrb[0].mxu0
    %v652 = vpop.f32.mrb[0].mxu0
    %653 = vdwg.mxu0
    %654 = vmatprep.subr.bf16.mxu0 0
    %655 = vmatpush1.bf16.msra.mxu0 %v502
    %656 = vmatprep.subr.bf16.mxu0 0
    %657 = vmatpush1.bf16.msra.mxu0 %v503
    %658 = vmatprep.subr.bf16.mxu0 0
    %659 = vmatpush1.bf16.msra.mxu0 %v504
    %660 = vmatprep.subr.bf16.mxu0 0
    %661 = vmatpush1.bf16.msra.mxu0 %v505
    %662 = vmatprep.subr.bf16.mxu0 0
    %663 = vmatpush1.bf16.msra.mxu0 %v506
    %664 = vmatprep.subr.bf16.mxu0 0
    %665 = vmatpush1.bf16.msra.mxu0 %v507
    %666 = vmatprep.subr.bf16.mxu0 0
    %667 = vmatpush1.bf16.msra.mxu0 %v508
    %668 = vmatprep.subr.bf16.mxu0 0
    %669 = vmatpush1.bf16.msra.mxu0 %v509
    %670 = vmatprep.subr.bf16.mxu0 0
    %671 = vmatpush1.bf16.msra.mxu0 %v510
    %672 = vmatprep.subr.bf16.mxu0 0
    %673 = vmatpush1.bf16.msra.mxu0 %v511
    %674 = vmatprep.subr.bf16.mxu0 0
    %675 = vmatpush1.bf16.msra.mxu0 %v512
    %676 = vmatprep.subr.bf16.mxu0 0
    %677 = vmatpush1.bf16.msra.mxu0 %v513
    %678 = vmatprep.subr.bf16.mxu0 0
    %679 = vmatpush1.bf16.msra.mxu0 %v514
    %680 = vmatprep.subr.bf16.mxu0 0
    %681 = vmatpush1.bf16.msra.mxu0 %v515
    %682 = vmatprep.subr.bf16.mxu0 0
    %683 = vmatpush1.bf16.msra.mxu0 %v516
    %684 = vmatprep.subr.bf16.mxu0 0
    %685 = vmatpush1.bf16.msra.mxu0 %v517
    %686 = vmatprep.mubr.bf16.mxu0 %v225
    %687 = vmatmul.mubr.bf16.gmra.mrb[0].mxu0 %v224
    %v688 = vpop.f32.mrb[0].mxu0
    %v689 = vadd.f32 %v649, %v688
    %v690 = vpop.f32.mrb[0].mxu0
    %v691 = vpop.f32.mrb[0].mxu0
    %v692 = vpop.f32.mrb[0].mxu0
    %693 = vdwg.mxu0
    %694 = vmatprep.subr.bf16.mxu0 0
    %695 = vmatpush1.bf16.msra.mxu0 %v518
    %696 = vmatprep.subr.bf16.mxu0 0
    %697 = vmatpush1.bf16.msra.mxu0 %v519
    %698 = vmatprep.subr.bf16.mxu0 0
    %699 = vmatpush1.bf16.msra.mxu0 %v520
    %700 = vmatprep.subr.bf16.mxu0 0
    %701 = vmatpush1.bf16.msra.mxu0 %v521
    %702 = vmatprep.subr.bf16.mxu0 0
    %703 = vmatpush1.bf16.msra.mxu0 %v522
    %704 = vmatprep.subr.bf16.mxu0 0
    %705 = vmatpush1.bf16.msra.mxu0 %v523
    %706 = vmatprep.subr.bf16.mxu0 0
    %707 = vmatpush1.bf16.msra.mxu0 %v524
    %708 = vmatprep.subr.bf16.mxu0 0
    %709 = vmatpush1.bf16.msra.mxu0 %v525
    %710 = vmatprep.subr.bf16.mxu0 0
    %711 = vmatpush1.bf16.msra.mxu0 %v526
    %712 = vmatprep.subr.bf16.mxu0 0
    %713 = vmatpush1.bf16.msra.mxu0 %v527
    %714 = vmatprep.subr.bf16.mxu0 0
    %715 = vmatpush1.bf16.msra.mxu0 %v528
    %716 = vmatprep.subr.bf16.mxu0 0
    %717 = vmatpush1.bf16.msra.mxu0 %v529
    %718 = vmatprep.subr.bf16.mxu0 0
    %719 = vmatpush1.bf16.msra.mxu0 %v530
    %720 = vmatprep.subr.bf16.mxu0 0
    %721 = vmatpush1.bf16.msra.mxu0 %v531
    %722 = vmatprep.subr.bf16.mxu0 0
    %723 = vmatpush1.bf16.msra.mxu0 %v532
    %724 = vmatprep.subr.bf16.mxu0 0
    %725 = vmatpush1.bf16.msra.mxu0 %v533
    %726 = vmatprep.mubr.bf16.mxu0 %v227
    %727 = vmatmul.mubr.bf16.gmra.mrb[0].mxu0 %v226
    %v728 = vpop.f32.mrb[0].mxu0
    %v729 = vadd.f32 %v689, %v728
    %v730 = vpop.f32.mrb[0].mxu0
    %v731 = vpop.f32.mrb[0].mxu0
    %v732 = vpop.f32.mrb[0].mxu0
    %733 = vdwg.mxu0
    %734 = vmatprep.subr.bf16.mxu0 0
    %735 = vmatpush1.bf16.msra.mxu0 %v534
    %736 = vmatprep.subr.bf16.mxu0 0
    %737 = vmatpush1.bf16.msra.mxu0 %v535
    %738 = vmatprep.subr.bf16.mxu0 0
    %739 = vmatpush1.bf16.msra.mxu0 %v536
    %740 = vmatprep.subr.bf16.mxu0 0
    %741 = vmatpush1.bf16.msra.mxu0 %v537
    %742 = vmatprep.subr.bf16.mxu0 0
    %743 = vmatpush1.bf16.msra.mxu0 %v538
    %744 = vmatprep.subr.bf16.mxu0 0
    %745 = vmatpush1.bf16.msra.mxu0 %v539
    %746 = vmatprep.subr.bf16.mxu0 0
    %747 = vmatpush1.bf16.msra.mxu0 %v540
    %748 = vmatprep.subr.bf16.mxu0 0
    %749 = vmatpush1.bf16.msra.mxu0 %v541
    %750 = vmatprep.subr.bf16.mxu0 0
    %751 = vmatpush1.bf16.msra.mxu0 %v542
    %752 = vmatprep.subr.bf16.mxu0 0
    %753 = vmatpush1.bf16.msra.mxu0 %v543
    %754 = vmatprep.subr.bf16.mxu0 0
    %755 = vmatpush1.bf16.msra.mxu0 %v544
    %756 = vmatprep.subr.bf16.mxu0 0
    %757 = vmatpush1.bf16.msra.mxu0 %v545
    %758 = vmatprep.subr.bf16.mxu0 0
    %759 = vmatpush1.bf16.msra.mxu0 %v546
    %760 = vmatprep.subr.bf16.mxu0 0
    %761 = vmatpush1.bf16.msra.mxu0 %v547
    %762 = vmatprep.subr.bf16.mxu0 0
    %763 = vmatpush1.bf16.msra.mxu0 %v548
    %764 = vmatprep.subr.bf16.mxu0 0
    %765 = vmatpush1.bf16.msra.mxu0 %v549
    %766 = vmatprep.mubr.bf16.mxu0 %v229
    %767 = vmatmul.mubr.bf16.gmra.mrb[0].mxu0 %v228
    %v768 = vpop.f32.mrb[0].mxu0
    %v769 = vadd.f32 %v729, %v768
    %v770 = vpop.f32.mrb[0].mxu0
    %v771 = vpop.f32.mrb[0].mxu0
    %v772 = vpop.f32.mrb[0].mxu0
    %773 = vdwg.mxu0
    %v774 = vadd.f32 %v177, %v769
    %775 = vst [vmem:[#allocation2] sm:$0x3] %v774
    %v776 = vld [vmem:[#allocation3] sm:$0x3]
    %v779 = vcombine.high %v47, %v47
    %v781 = vunpack.c.l.s4 1983009808
    %v782 = vunpack.c.0.s8 %v781
    %v783 = vlaneseq
    %v784 = vshrl.u32 %v783, 7
    %v785 = vsub.s32 %v782, %v784
    %v786 = vrot.slane %v47, %v785
    %v788 = vunpack.c.l.s4 1983009808
    %v789 = vunpack.c.0.s8 %v788
    %v790 = vlaneseq
    %v791 = vshrl.u32 %v790, 7
    %v792 = vsub.s32 %v789, %v791
    %v793 = vrot.slane %v779, %v792
    %v794 = vcombine.high %v786, %v786
    %v795 = vcombine.high %v793, %v793
    %v796 = vcombine.high %v48, %v48
    %v798 = vunpack.c.l.s4 1983009808
    %v799 = vunpack.c.0.s8 %v798
    %v800 = vlaneseq
    %v801 = vshrl.u32 %v800, 7
    %v802 = vsub.s32 %v799, %v801
    %v803 = vrot.slane %v48, %v802
    %v805 = vunpack.c.l.s4 1983009808
    %v806 = vunpack.c.0.s8 %v805
    %v807 = vlaneseq
    %v808 = vshrl.u32 %v807, 7
    %v809 = vsub.s32 %v806, %v808
    %v810 = vrot.slane %v796, %v809
    %v811 = vcombine.high %v803, %v803
    %v812 = vcombine.high %v810, %v810
    %v821 = vpack.c.bf16 %v786, %v786
    %v822 = vpack.c.bf16 %v794, %v794
    %v823 = vpack.c.bf16 %v793, %v793
    %v824 = vpack.c.bf16 %v795, %v795
    %v825 = vpack.c.bf16 %v803, %v803
    %v826 = vpack.c.bf16 %v811, %v811
    %v827 = vpack.c.bf16 %v810, %v810
    %v828 = vpack.c.bf16 %v812, %v812
    %829 = vmatprep.subr.bf16.mxu0 0
    %830 = vmatpush1.bf16.msra.mxu0 %v486
    %831 = vmatprep.subr.bf16.mxu0 0
    %832 = vmatpush1.bf16.msra.mxu0 %v487
    %833 = vmatprep.subr.bf16.mxu0 0
    %834 = vmatpush1.bf16.msra.mxu0 %v488
    %835 = vmatprep.subr.bf16.mxu0 0
    %836 = vmatpush1.bf16.msra.mxu0 %v489
    %837 = vmatprep.subr.bf16.mxu0 0
    %838 = vmatpush1.bf16.msra.mxu0 %v490
    %839 = vmatprep.subr.bf16.mxu0 0
    %840 = vmatpush1.bf16.msra.mxu0 %v491
    %841 = vmatprep.subr.bf16.mxu0 0
    %842 = vmatpush1.bf16.msra.mxu0 %v492
    %843 = vmatprep.subr.bf16.mxu0 0
    %844 = vmatpush1.bf16.msra.mxu0 %v493
    %845 = vmatprep.subr.bf16.mxu0 0
    %846 = vmatpush1.bf16.msra.mxu0 %v494
    %847 = vmatprep.subr.bf16.mxu0 0
    %848 = vmatpush1.bf16.msra.mxu0 %v495
    %849 = vmatprep.subr.bf16.mxu0 0
    %850 = vmatpush1.bf16.msra.mxu0 %v496
    %851 = vmatprep.subr.bf16.mxu0 0
    %852 = vmatpush1.bf16.msra.mxu0 %v497
    %853 = vmatprep.subr.bf16.mxu0 0
    %854 = vmatpush1.bf16.msra.mxu0 %v498
    %855 = vmatprep.subr.bf16.mxu0 0
    %856 = vmatpush1.bf16.msra.mxu0 %v499
    %857 = vmatprep.subr.bf16.mxu0 0
    %858 = vmatpush1.bf16.msra.mxu0 %v500
    %859 = vmatprep.subr.bf16.mxu0 0
    %860 = vmatpush1.bf16.msra.mxu0 %v501
    %861 = vmatprep.mubr.bf16.mxu0 %v822
    %862 = vmatmul.mubr.bf16.gmra.mrb[0].mxu0 %v821
    %v863 = vpop.f32.mrb[0].mxu0
    %v864 = vadd.f32 0.0, %v863
    %v865 = vpop.f32.mrb[0].mxu0
    %v866 = vpop.f32.mrb[0].mxu0
    %v867 = vpop.f32.mrb[0].mxu0
    %868 = vdwg.mxu0
    %869 = vmatprep.subr.bf16.mxu0 0
    %870 = vmatpush1.bf16.msra.mxu0 %v502
    %871 = vmatprep.subr.bf16.mxu0 0
    %872 = vmatpush1.bf16.msra.mxu0 %v503
    %873 = vmatprep.subr.bf16.mxu0 0
    %874 = vmatpush1.bf16.msra.mxu0 %v504
    %875 = vmatprep.subr.bf16.mxu0 0
    %876 = vmatpush1.bf16.msra.mxu0 %v505
    %877 = vmatprep.subr.bf16.mxu0 0
    %878 = vmatpush1.bf16.msra.mxu0 %v506
    %879 = vmatprep.subr.bf16.mxu0 0
    %880 = vmatpush1.bf16.msra.mxu0 %v507
    %881 = vmatprep.subr.bf16.mxu0 0
    %882 = vmatpush1.bf16.msra.mxu0 %v508
    %883 = vmatprep.subr.bf16.mxu0 0
    %884 = vmatpush1.bf16.msra.mxu0 %v509
    %885 = vmatprep.subr.bf16.mxu0 0
    %886 = vmatpush1.bf16.msra.mxu0 %v510
    %887 = vmatprep.subr.bf16.mxu0 0
    %888 = vmatpush1.bf16.msra.mxu0 %v511
    %889 = vmatprep.subr.bf16.mxu0 0
    %890 = vmatpush1.bf16.msra.mxu0 %v512
    %891 = vmatprep.subr.bf16.mxu0 0
    %892 = vmatpush1.bf16.msra.mxu0 %v513
    %893 = vmatprep.subr.bf16.mxu0 0
    %894 = vmatpush1.bf16.msra.mxu0 %v514
    %895 = vmatprep.subr.bf16.mxu0 0
    %896 = vmatpush1.bf16.msra.mxu0 %v515
    %897 = vmatprep.subr.bf16.mxu0 0
    %898 = vmatpush1.bf16.msra.mxu0 %v516
    %899 = vmatprep.subr.bf16.mxu0 0
    %900 = vmatpush1.bf16.msra.mxu0 %v517
    %901 = vmatprep.mubr.bf16.mxu0 %v824
    %902 = vmatmul.mubr.bf16.gmra.mrb[0].mxu0 %v823
    %v903 = vpop.f32.mrb[0].mxu0
    %v904 = vadd.f32 %v864, %v903
    %v905 = vpop.f32.mrb[0].mxu0
    %v906 = vpop.f32.mrb[0].mxu0
    %v907 = vpop.f32.mrb[0].mxu0
    %908 = vdwg.mxu0
    %909 = vmatprep.subr.bf16.mxu0 0
    %910 = vmatpush1.bf16.msra.mxu0 %v518
    %911 = vmatprep.subr.bf16.mxu0 0
    %912 = vmatpush1.bf16.msra.mxu0 %v519
    %913 = vmatprep.subr.bf16.mxu0 0
    %914 = vmatpush1.bf16.msra.mxu0 %v520
    %915 = vmatprep.subr.bf16.mxu0 0
    %916 = vmatpush1.bf16.msra.mxu0 %v521
    %917 = vmatprep.subr.bf16.mxu0 0
    %918 = vmatpush1.bf16.msra.mxu0 %v522
    %919 = vmatprep.subr.bf16.mxu0 0
    %920 = vmatpush1.bf16.msra.mxu0 %v523
    %921 = vmatprep.subr.bf16.mxu0 0
    %922 = vmatpush1.bf16.msra.mxu0 %v524
    %923 = vmatprep.subr.bf16.mxu0 0
    %924 = vmatpush1.bf16.msra.mxu0 %v525
    %925 = vmatprep.subr.bf16.mxu0 0
    %926 = vmatpush1.bf16.msra.mxu0 %v526
    %927 = vmatprep.subr.bf16.mxu0 0
    %928 = vmatpush1.bf16.msra.mxu0 %v527
    %929 = vmatprep.subr.bf16.mxu0 0
    %930 = vmatpush1.bf16.msra.mxu0 %v528
    %931 = vmatprep.subr.bf16.mxu0 0
    %932 = vmatpush1.bf16.msra.mxu0 %v529
    %933 = vmatprep.subr.bf16.mxu0 0
    %934 = vmatpush1.bf16.msra.mxu0 %v530
    %935 = vmatprep.subr.bf16.mxu0 0
    %936 = vmatpush1.bf16.msra.mxu0 %v531
    %937 = vmatprep.subr.bf16.mxu0 0
    %938 = vmatpush1.bf16.msra.mxu0 %v532
    %939 = vmatprep.subr.bf16.mxu0 0
    %940 = vmatpush1.bf16.msra.mxu0 %v533
    %941 = vmatprep.mubr.bf16.mxu0 %v826
    %942 = vmatmul.mubr.bf16.gmra.mrb[0].mxu0 %v825
    %v943 = vpop.f32.mrb[0].mxu0
    %v944 = vadd.f32 %v904, %v943
    %v945 = vpop.f32.mrb[0].mxu0
    %v946 = vpop.f32.mrb[0].mxu0
    %v947 = vpop.f32.mrb[0].mxu0
    %948 = vdwg.mxu0
    %949 = vmatprep.subr.bf16.mxu0 0
    %950 = vmatpush1.bf16.msra.mxu0 %v534
    %951 = vmatprep.subr.bf16.mxu0 0
    %952 = vmatpush1.bf16.msra.mxu0 %v535
    %953 = vmatprep.subr.bf16.mxu0 0
    %954 = vmatpush1.bf16.msra.mxu0 %v536
    %955 = vmatprep.subr.bf16.mxu0 0
    %956 = vmatpush1.bf16.msra.mxu0 %v537
    %957 = vmatprep.subr.bf16.mxu0 0
    %958 = vmatpush1.bf16.msra.mxu0 %v538
    %959 = vmatprep.subr.bf16.mxu0 0
    %960 = vmatpush1.bf16.msra.mxu0 %v539
    %961 = vmatprep.subr.bf16.mxu0 0
    %962 = vmatpush1.bf16.msra.mxu0 %v540
    %963 = vmatprep.subr.bf16.mxu0 0
    %964 = vmatpush1.bf16.msra.mxu0 %v541
    %965 = vmatprep.subr.bf16.mxu0 0
    %966 = vmatpush1.bf16.msra.mxu0 %v542
    %967 = vmatprep.subr.bf16.mxu0 0
    %968 = vmatpush1.bf16.msra.mxu0 %v543
    %969 = vmatprep.subr.bf16.mxu0 0
    %970 = vmatpush1.bf16.msra.mxu0 %v544
    %971 = vmatprep.subr.bf16.mxu0 0
    %972 = vmatpush1.bf16.msra.mxu0 %v545
    %973 = vmatprep.subr.bf16.mxu0 0
    %974 = vmatpush1.bf16.msra.mxu0 %v546
    %975 = vmatprep.subr.bf16.mxu0 0
    %976 = vmatpush1.bf16.msra.mxu0 %v547
    %977 = vmatprep.subr.bf16.mxu0 0
    %978 = vmatpush1.bf16.msra.mxu0 %v548
    %979 = vmatprep.subr.bf16.mxu0 0
    %980 = vmatpush1.bf16.msra.mxu0 %v549
    %981 = vmatprep.mubr.bf16.mxu0 %v828
    %982 = vmatmul.mubr.bf16.gmra.mrb[0].mxu0 %v827
    %v983 = vpop.f32.mrb[0].mxu0
    %v984 = vadd.f32 %v944, %v983
    %v985 = vpop.f32.mrb[0].mxu0
    %v986 = vpop.f32.mrb[0].mxu0
    %v987 = vpop.f32.mrb[0].mxu0
    %988 = vdwg.mxu0
    %v989 = vadd.f32 %v776, %v984
    %990 = vst [vmem:[#allocation3] sm:$0x3] %v989
    // Predicated region
    $region34: #{adversarial_losses.1} parent=1 // pred_check
      %p991 = pneg %p39
    $region35: #{adversarial_losses.1} parent=1 // pred_check_branch
      %993 = sbr.rel (%p991) target = $region37
    $region36: #{adversarial_losses.1} parent=1 // pred_region
      %v994 = vld [vmem:[%s3] sm:$0x1]
      %v995 = vld [vmem:[%s4] sm:$0x1]
      %v996 = vld [vmem:[#allocation2] sm:$0x3]
      %v998 = vlaneseq
      %v999 = vshrl.u32 %v998, 7
      %v1000 = vsub.s32 0, %v999
      %v1001 = vrot.slane %v994, %v1000
      %v1003 = vadd.f32 %v996, %v1001
      %v1004 = vld [vmem:[#allocation3] sm:$0x3]
      %v1005 = vadd.f32 %v1004, %v1001
      %vm1006 = vcmp.ge.f32.partialorder %v1003, 0.0
      %v1007 = vmul.f32 %v1003, 0.2
      %v1008 = vsel %vm1006, %v1003, %v1007
      %vm1009 = vcmp.ge.f32.partialorder %v1005, 0.0
      %v1010 = vmul.f32 %v1005, 0.2
      %v1011 = vsel %vm1009, %v1005, %v1010
      %v1013 = vlaneseq
      %v1014 = vshrl.u32 %v1013, 7
      %v1015 = vsub.s32 0, %v1014
      %v1016 = vrot.slane %v995, %v1015
      %v1018 = vmul.f32 %v1008, %v1016
      %vm1019 = vcmask 1041408
      %v1020 = vsel %vm1019, %v1018, 0.0
      %1021 = vadd.xlane.f32.xlu0 %v1020
      %v1022 = vpop.xlane.xlu0 %1021
      %s1023 = sld [smem:[#allocation4]]
      %v1024 = vstv %s1023
      %v1025 = vadd.f32 %v1022, %v1024
      %v1026 = vmul.f32 %v1011, %v1016
      %v1027 = vsel %vm1019, %v1026, 0.0
      %1028 = vadd.xlane.f32.xlu0 %v1027
      %v1029 = vpop.xlane.xlu0 %1028
      %v1030 = vadd.f32 %v1029, %v1024
      %vm1031 = vcmask 1024
      %v1032 = vsel %vm1031, %v1025, 0.0
      %1033 = vadd.xlane.f32.xlu0 %v1032
      %v1034 = vpop.xlane.xlu0 %1033
      %v1035 = vrot.slane %v1034, 4
      %v1036 = vadd.f32 %v1034, %v1035
      %v1037 = vrot.slane %v1036, 2
      %v1038 = vadd.f32 %v1036, %v1037
      %v1039 = vrot.slane %v1038, 1
      %v1040 = vadd.f32 %v1038, %v1039
      %s1041 = vtos %v1040
      %v1042 = vrcp.pop 2.0
      %s1043 = vtos %v1042
      %s1044 = smul.f32 %s1041, %s1043
      %v1045 = vsel %vm1031, %v1030, 0.0
      %1046 = vadd.xlane.f32.xlu0 %v1045
      %v1047 = vpop.xlane.xlu0 %1046
      %v1048 = vrot.slane %v1047, 4
      %v1049 = vadd.f32 %v1047, %v1048
      %v1050 = vrot.slane %v1049, 2
      %v1051 = vadd.f32 %v1049, %v1050
      %v1052 = vrot.slane %v1051, 1
      %v1053 = vadd.f32 %v1051, %v1052
      %s1054 = vtos %v1053
      %v1055 = vrcp.pop 2.0
      %s1056 = vtos %v1055
      %s1057 = smul.f32 %s1054, %s1056
      %v1058 = vstv %s1057
      %v1059 = vsub.f32 %v1025, %v1058
      %v1060 = vsub.f32 0.0, %v1059
      %v1061 = vmax.f32 %v1060, 0.0
      %v1062 = vand.u32 2147483647, %v1060
      %v1063 = vsub.f32 0.0, %v1062
      %v1064 = vmul.f32 %v1063, 1.442695
      %v1065 = vpow.pop %v1064
      %v1066 = vadd.f32 %v1065, 1.0
      %v1067 = vlog2.pop %v1066
      %v1068 = vmul.f32 %v1067, 0.6931472
      %v1069 = vmul.f32 -0.5, %v1065
      %v1070 = vadd.f32 %v1069, 1.0
      %v1071 = vmul.f32 %v1070, %v1065
      %v1072 = vand.u32 2147483647, %v1065
      %vm1073 = vcmp.lt.f32.partialorder %v1072, 0.0004427343
      %v1074 = vsel %vm1073, %v1071, %v1068
      %v1075 = vadd.f32 %v1061, %v1074
      %v1076 = vsel %vm1031, %v1075, 0.0
      %1077 = vadd.xlane.f32.xlu0 %v1076
      %v1078 = vpop.xlane.xlu0 %1077
      %v1079 = vrot.slane %v1078, 4
      %v1080 = vadd.f32 %v1078, %v1079
      %v1081 = vrot.slane %v1080, 2
      %v1082 = vadd.f32 %v1080, %v1081
      %v1083 = vrot.slane %v1082, 1
      %v1084 = vadd.f32 %v1082, %v1083
      %s1085 = vtos %v1084
      %v1086 = vrcp.pop 2.0
      %s1087 = vtos %v1086
      %s1088 = smul.f32 %s1085, %s1087
      %v1089 = vstv %s1044
      %v1090 = vsub.f32 %v1030, %v1089
      %v1091 = vmax.f32 %v1090, 0.0
      %v1092 = vand.u32 2147483647, %v1090
      %v1093 = vsub.f32 0.0, %v1092
      %v1094 = vmul.f32 %v1093, 1.442695
      %v1095 = vpow.pop %v1094
      %v1096 = vadd.f32 %v1095, 1.0
      %v1097 = vlog2.pop %v1096
      %v1098 = vmul.f32 %v1097, 0.6931472
      %v1099 = vmul.f32 -0.5, %v1095
      %v1100 = vadd.f32 %v1099, 1.0
      %v1101 = vmul.f32 %v1100, %v1095
      %v1102 = vand.u32 2147483647, %v1095
      %vm1103 = vcmp.lt.f32.partialorder %v1102, 0.0004427343
      %v1104 = vsel %vm1103, %v1101, %v1098
      %v1105 = vadd.f32 %v1091, %v1104
      %v1106 = vsel %vm1031, %v1105, 0.0
      %1107 = vadd.xlane.f32.xlu0 %v1106
      %v1108 = vpop.xlane.xlu0 %1107
      %v1109 = vrot.slane %v1108, 4
      %v1110 = vadd.f32 %v1108, %v1109
      %v1111 = vrot.slane %v1110, 2
      %v1112 = vadd.f32 %v1110, %v1111
      %v1113 = vrot.slane %v1112, 1
      %v1114 = vadd.f32 %v1112, %v1113
      %s1115 = vtos %v1114
      %v1116 = vrcp.pop 2.0
      %s1117 = vtos %v1116
      %s1118 = smul.f32 %s1115, %s1117
      %s1119 = sadd.f32 %s1088, %s1118
      %s1120 = smul.f32 %s1119, 0.5
      %v1121 = vmax.f32 %v1059, 0.0
      %v1122 = vand.u32 2147483647, %v1059
      %v1123 = vsub.f32 0.0, %v1122
      %v1124 = vmul.f32 %v1123, 1.442695
      %v1125 = vpow.pop %v1124
      %v1126 = vadd.f32 %v1125, 1.0
      %v1127 = vlog2.pop %v1126
      %v1128 = vmul.f32 %v1127, 0.6931472
      %v1129 = vmul.f32 -0.5, %v1125
      %v1130 = vadd.f32 %v1129, 1.0
      %v1131 = vmul.f32 %v1130, %v1125
      %v1132 = vand.u32 2147483647, %v1125
      %vm1133 = vcmp.lt.f32.partialorder %v1132, 0.0004427343
      %v1134 = vsel %vm1133, %v1131, %v1128
      %v1135 = vadd.f32 %v1121, %v1134
      %v1136 = vsel %vm1031, %v1135, 0.0
      %1137 = vadd.xlane.f32.xlu0 %v1136
      %v1138 = vpop.xlane.xlu0 %1137
      %v1139 = vrot.slane %v1138, 4
      %v1140 = vadd.f32 %v1138, %v1139
      %v1141 = vrot.slane %v1140, 2
      %v1142 = vadd.f32 %v1140, %v1141
      %v1143 = vrot.slane %v1142, 1
      %v1144 = vadd.f32 %v1142, %v1143
      %s1145 = vtos %v1144
      %v1146 = vrcp.pop 2.0
      %s1147 = vtos %v1146
      %s1148 = smul.f32 %s1145, %s1147
      %v1149 = vsub.f32 0.0, %v1090
      %v1150 = vmax.f32 %v1149, 0.0
      %v1151 = vand.u32 2147483647, %v1149
      %v1152 = vsub.f32 0.0, %v1151
      %v1153 = vmul.f32 %v1152, 1.442695
      %v1154 = vpow.pop %v1153
      %v1155 = vadd.f32 %v1154, 1.0
      %v1156 = vlog2.pop %v1155
      %v1157 = vmul.f32 %v1156, 0.6931472
      %v1158 = vmul.f32 -0.5, %v1154
      %v1159 = vadd.f32 %v1158, 1.0
      %v1160 = vmul.f32 %v1159, %v1154
      %v1161 = vand.u32 2147483647, %v1154
      %vm1162 = vcmp.lt.f32.partialorder %v1161, 0.0004427343
      %v1163 = vsel %vm1162, %v1160, %v1157
      %v1164 = vadd.f32 %v1150, %v1163
      %v1165 = vsel %vm1031, %v1164, 0.0
      %1166 = vadd.xlane.f32.xlu0 %v1165
      %v1167 = vpop.xlane.xlu0 %1166
      %v1168 = vrot.slane %v1167, 4
      %v1169 = vadd.f32 %v1167, %v1168
      %v1170 = vrot.slane %v1169, 2
      %v1171 = vadd.f32 %v1169, %v1170
      %v1172 = vrot.slane %v1171, 1
      %v1173 = vadd.f32 %v1171, %v1172
      %s1174 = vtos %v1173
      %v1175 = vrcp.pop 2.0
      %s1176 = vtos %v1175
      %s1177 = smul.f32 %s1174, %s1176
      %s1178 = sadd.f32 %s1148, %s1177
      %s1179 = smul.f32 %s1178, 0.5
      %v1180 = vlaneseq
      %v1181 = vand.u32 %v1180, 127
      %vm1182 = vcmp.eq.s32.totalorder %v1181, 0
      %v1183 = vstv %s1120
      %v1184 = vsel %vm1182, %v1183, 0.0
      %vm1185 = vcmp.eq.s32.totalorder %v1181, 1
      %v1186 = vstv %s1088
      %v1187 = vsel %vm1185, %v1186, 0.0
      %v1188 = vadd.f32 %v1184, %v1187
      %vm1189 = vcmp.eq.s32.totalorder %v1181, 2
      %v1190 = vstv %s1118
      %v1191 = vsel %vm1189, %v1190, 0.0
      %v1192 = vadd.f32 %v1188, %v1191
      %vm1193 = vcmp.eq.s32.totalorder %v1181, 3
      %v1194 = vsel %vm1193, %v1089, 0.0
      %v1195 = vadd.f32 %v1192, %v1194
      %vm1196 = vcmp.eq.s32.totalorder %v1181, 4
      %v1197 = vsel %vm1196, %v1058, 0.0
      %v1198 = vadd.f32 %v1195, %v1197
      %vm1199 = vcmp.eq.s32.totalorder %v1181, 5
      %v1200 = vstv %s1179
      %v1201 = vsel %vm1199, %v1200, 0.0
      %v1202 = vadd.f32 %v1198, %v1201
      %1203 = vst [vmem:[%s6] sm:$0x1] %v1202
    $region37: #{adversarial_losses.1} parent=1 // pred_fallthru
      _
    // Predicated region
    $region38: #{adversarial_losses.1} parent=1 // pred_check
      _
    $region39: #{adversarial_losses.1} parent=1 // pred_check_branch
      %1205 = sbr.rel (0) target = $region41
    $region40: #{adversarial_losses.1} parent=1 // pred_region
      _
    $region41: #{adversarial_losses.1} parent=1 // pred_fallthru
      _
    // Predicated region
    $region42: #{adversarial_losses.1} parent=1 // pred_check
      _
    $region43: #{adversarial_losses.1} parent=1 // pred_check_branch
      %1207 = sbr.rel (0) target = $region45
    $region44: #{adversarial_losses.1} parent=1 // pred_region
      _
    $region45: #{adversarial_losses.1} parent=1 // pred_fallthru
      _
    %1208 = vsyncpa [#allocation6], 1

</llo_original>
